<compile_context>
chip_gen: v7x
topology: tpu7x:2x2x1
jax: 0.10.0
libtpu: 0.0.40
codegen_flags: <defaults>
</compile_context>

<pallas_src>
import functools

import jax
import jax.numpy as jnp
from jax.experimental import pallas as pl
from jax.experimental.pallas import tpu as pltpu

EPS = 1e-6


# ---------------------------------------------------------------------------
# Kernel
# ---------------------------------------------------------------------------
def ffn_kernel(x_ref, w1_ref, b1_ref, w2_ref, b2_ref, o_ref):
    # ---- LayerNorm (normalization only; gamma/beta are folded into w1/b1) ----
    x = x_ref[...].astype(jnp.float32)                        # (TM, D)
    mean = jnp.mean(x, axis=-1, keepdims=True)
    var = jnp.mean(jnp.square(x - mean), axis=-1, keepdims=True)
    xn = (x - mean) * jax.lax.rsqrt(var + EPS)

    # ---- First linear + ReLU: bf16 MXU operands, f32 accumulation ----
    h = jnp.dot(xn.astype(jnp.bfloat16), w1_ref[...],
                preferred_element_type=jnp.float32) + b1_ref[...]
    h = jnp.maximum(h, 0.0).astype(jnp.bfloat16)              # (TM, F) bf16 intermediate
    # dropout_1: identity in eval mode.

    # ---- Second linear ----
    y = jnp.dot(h, w2_ref[...], preferred_element_type=jnp.float32) + b2_ref[...]
    # dropout_2: identity in eval mode.

    # ---- Residual ----
    o_ref[...] = (y + x).astype(o_ref.dtype)


# ---------------------------------------------------------------------------
# Sizing helpers (pure Python, run outside jit)
# ---------------------------------------------------------------------------
def _vmem_budget_bytes():
    try:
        cap = int(pltpu.get_tpu_info().vmem_capacity_bytes)
    except Exception:
        cap = 128 * 1024 * 1024
    # ~85% of physical VMEM, capped at 112 MiB -> ~54 MiB on v7x, ~108 MiB on v5e/v6e,
    # leaving headroom for Mosaic internal scratch.
    return min(int(cap * 0.85), 112 * 1024 * 1024)


def _tile_footprint_bytes(tm, d_model, d_ff, x_itemsize):
    weights = 2 * d_model * d_ff * 2                      # bf16 w1 + w2, single-buffered
    biases = (d_ff + d_model) * 4
    io = 2 * 2 * tm * d_model * x_itemsize                # x / out, double-buffered
    inter = (tm * d_model * 4                             # x in f32
             + tm * d_model * 2                           # xn in bf16
             + tm * d_ff * 4                              # pre-ReLU f32
             + tm * d_ff * 2)                             # ReLU output bf16
    return weights + biases + io + inter


def _auto_block_m(d_model, d_ff, x_itemsize, budget):
    for cand in (1024, 512, 256):
        if _tile_footprint_bytes(cand, d_model, d_ff, x_itemsize) <= budget:
            return cand
    return 256


def _align_tm(tm):
    if tm >= 256:
        return (tm // 256) * 256      # fill the 256x256 MXU along M (v6e/v7x)
    if tm >= 16:
        return (tm // 16) * 16        # full packed-bf16 [16,128] vregs
    return max(8, (tm // 8) * 8)      # sublane multiple, tiny-M fallback


# ---------------------------------------------------------------------------
# One-time parameter preparation (outside the per-call jit path)
# ---------------------------------------------------------------------------
def prepare_ffn_params(ln_gamma, ln_beta, w1, b1, w2, b2):
    """Fold LN affine into w1/b1 and cast weights to bf16 once.

    w1: (d_model, d_ff), w2: (d_ff, d_model), i.e. (in, out) layout.
    Returns (w1_folded_bf16, b1_folded_f32[1,F], w2_bf16, b2_f32[1,D]).
    """
    g = ln_gamma.reshape(-1).astype(jnp.float32)
    be = ln_beta.reshape(-1).astype(jnp.float32)
    w1f = w1.astype(jnp.float32)
    b1_folded = (b1.reshape(1, -1).astype(jnp.float32)
                 + (be @ w1f)[None, :])                       # (1, F)
    w1_folded = (g[:, None] * w1f).astype(jnp.bfloat16)       # (D, F)
    w2b = w2.astype(jnp.bfloat16)                             # (F, D)
    b2f = b2.reshape(1, -1).astype(jnp.float32)               # (1, D)
    return w1_folded, b1_folded, w2b, b2f


# ---------------------------------------------------------------------------
# Pallas call (jitted core) + public wrapper
# ---------------------------------------------------------------------------
@functools.partial(jax.jit, static_argnames=("block_m", "vmem_limit_bytes"))
def _positionwise_ffn_call(x, w1b, b1, w2b, b2, *, block_m, vmem_limit_bytes):
    B, S, D = x.shape
    F = w1b.shape[1]
    M = B * S
    tm = block_m

    x2 = x.reshape(M, D)
    m_pad = pl.cdiv(M, tm) * tm
    if m_pad != M:
        x2 = jnp.pad(x2, ((0, m_pad - M), (0, 0)))

    cost = pl.CostEstimate(
        flops=4 * m_pad * D * F,                     # two matmuls: 2*M*D*F each
        transcendentals=m_pad,                       # one rsqrt per token
        bytes_accessed=int(
            2 * m_pad * D * x2.dtype.itemsize        # x in + out
            + 2 * D * F * 2                          # bf16 weights
            + (F + D) * 4),                          # biases (f32)
    )

    resident = dict(pipeline_mode=pl.Buffered(1))    # grid-invariant -> single buffer

    out2 = pl.pallas_call(
        ffn_kernel,
        out_shape=jax.ShapeDtypeStruct((m_pad, D), x.dtype),
        grid_spec=pltpu.PrefetchScalarGridSpec(
            num_scalar_prefetch=0,
            grid=(m_pad // tm,),
            in_specs=[
                pl.BlockSpec((tm, D), lambda i: (i, 0)),              # x tile (pipelined)
                pl.BlockSpec((D, F), lambda i: (0, 0), **resident),   # w1 (LN-folded, bf16)
                pl.BlockSpec((1, F), lambda i: (0, 0), **resident),   # b1 (folded, f32)
                pl.BlockSpec((F, D), lambda i: (0, 0), **resident),   # w2 bf16
                pl.BlockSpec((1, D), lambda i: (0, 0), **resident),   # b2 f32
            ],
            out_specs=pl.BlockSpec((tm, D), lambda i: (i, 0)),
        ),
        compiler_params=pltpu.CompilerParams(
            dimension_semantics=("parallel",),       # independent token tiles -> megacore
            vmem_limit_bytes=vmem_limit_bytes,
        ),
        cost_estimate=cost,
    )(x2, w1b, b1, w2b, b2)

    return out2[:M].reshape(B, S, D)


def positionwise_ffn(x, w1_folded, b1_folded, w2_bf16, b2,
                     *, block_m=None, vmem_limit_bytes=None):
    """x: (B, S, d_model). Params as returned by prepare_ffn_params (called once)."""
    B, S, D = x.shape
    F = w1_folded.shape[1]
    M = B * S

    budget = int(vmem_limit_bytes) if vmem_limit_bytes is not None else _vmem_budget_bytes()
    itemsize = jnp.dtype(x.dtype).itemsize
    bm = block_m if block_m is not None else _auto_block_m(D, F, itemsize, budget)
    tm = _align_tm(min(bm, M))

    return _positionwise_ffn_call(x, w1_folded, b1_folded, w2_bf16, b2,
                                  block_m=int(tm), vmem_limit_bytes=budget)


# ---------------------------------------------------------------------------
# Pure-JAX f32 reference (matches the PyTorch module in eval mode)
# ---------------------------------------------------------------------------
def reference_ffn(x, ln_gamma, ln_beta, w1, b1, w2, b2):
    xf = x.astype(jnp.float32)
    mean = jnp.mean(xf, axis=-1, keepdims=True)
    var = jnp.mean((xf - mean) ** 2, axis=-1, keepdims=True)
    xn = (xf - mean) * jax.lax.rsqrt(var + EPS) * ln_gamma + ln_beta
    h = jnp.maximum(xn @ w1 + b1, 0.0)
    y = h @ w2 + b2
    return (y + xf).astype(x.dtype)


if __name__ == "__main__":
    # Small, lane-dense / MXU-aligned correctness-check shapes.
    B, S, D, Fh = 2, 64, 128, 256
    key = jax.random.PRNGKey(0)
    kx, k1, k2, k3, k4, k5, k6 = jax.random.split(key, 7)

    x = jax.random.normal(kx, (B, S, D), dtype=jnp.float32)

    # nn.Linear weights stored as (in, out) for the kernel.
    w1 = jax.random.normal(k1, (D, Fh), dtype=jnp.float32) * (1.0 / jnp.sqrt(D))
    b1 = jax.random.normal(k2, (Fh,), dtype=jnp.float32) * 0.01
    w2 = jax.random.normal(k3, (Fh, D), dtype=jnp.float32) * (1.0 / jnp.sqrt(Fh))
    b2 = jax.random.normal(k4, (D,), dtype=jnp.float32) * 0.01
    # Non-trivial LN affine to exercise the fold-into-w1 path.
    ln_gamma = 1.0 + 0.1 * jax.random.normal(k5, (D,), dtype=jnp.float32)
    ln_beta = 0.05 * jax.random.normal(k6, (D,), dtype=jnp.float32)

    # One-time parameter prep (LN fold + bf16 cast) outside the per-call jit path.
    w1b, b1f, w2b, b2f = prepare_ffn_params(ln_gamma, ln_beta, w1, b1, w2, b2)

    ref = reference_ffn(x, ln_gamma, ln_beta, w1, b1, w2, b2)

    # 1) Auto-sized tile path (single grid step at this small M).
    out_auto = jax.block_until_ready(positionwise_ffn(x, w1b, b1f, w2b, b2f))
    # 2) Explicit small tile to exercise the multi-step pipelined path (NOT a benchmark
    #    configuration; benchmark with M >= 8192 and real d_model/d_ff).
    out_tiled = jax.block_until_ready(
        positionwise_ffn(x, w1b, b1f, w2b, b2f, block_m=64))

    assert out_auto.shape == (B, S, D)
    assert out_tiled.shape == (B, S, D)
    # Tolerance relaxed for bf16 MXU operands (f32 accumulation).
    assert jnp.allclose(out_auto, ref, atol=3e-2, rtol=3e-2), "auto-tile mismatch vs reference"
    assert jnp.allclose(out_tiled, ref, atol=3e-2, rtol=3e-2), "tiled mismatch vs reference"

    print("KERNEL_OK")
</pallas_src>

<mosaic_0001>
module attributes {stable_mosaic.version = 11 : i64} {
  func.func @ffn_kernel(%arg0: i32, %arg1: memref<128x128xf32, #tpu.memory_space<vmem>>, %arg2: memref<128x256xbf16, #tpu.memory_space<vmem>>, %arg3: memref<1x256xf32, #tpu.memory_space<vmem>>, %arg4: memref<256x128xbf16, #tpu.memory_space<vmem>>, %arg5: memref<1x128xf32, #tpu.memory_space<vmem>>, %arg6: memref<128x128xf32, #tpu.memory_space<vmem>>) attributes {dimension_semantics = [#tpu.dimension_semantics<parallel>], iteration_bounds = array<i64: 1>, scalar_prefetch = 0 : i64, scratch_operands = 0 : i64, tpu.core_type = #tpu.core_type<tc>, window_params = [{transform_indices = @transform_0, window_bounds = array<i64: 128, 128>}, {pipeline_mode = #tpu.pipeline_mode<synchronous>, transform_indices = @transform_1, window_bounds = array<i64: 128, 256>}, {pipeline_mode = #tpu.pipeline_mode<synchronous>, transform_indices = @transform_2, window_bounds = array<i64: 1, 256>}, {pipeline_mode = #tpu.pipeline_mode<synchronous>, transform_indices = @transform_3, window_bounds = array<i64: 256, 128>}, {pipeline_mode = #tpu.pipeline_mode<synchronous>, transform_indices = @transform_4, window_bounds = array<i64: 1, 128>}, {transform_indices = @transform_5, window_bounds = array<i64: 128, 128>}]} {
    %c0 = arith.constant 0 : index
    %c0_0 = arith.constant 0 : index
    %0 = vector.load %arg1[%c0, %c0_0] : memref<128x128xf32, #tpu.memory_space<vmem>>, vector<128x128xf32>
    %cst = arith.constant dense<0.000000e+00> : vector<128xf32>
    %1 = vector.multi_reduction <add>, %0, %cst [1] : vector<128x128xf32> to vector<128xf32>
    %2 = vector.shape_cast %1 : vector<128xf32> to vector<128x1xf32>
    %cst_1 = arith.constant 1.280000e+02 : f32
    %3 = vector.broadcast %cst_1 : f32 to vector<128x1xf32>
    %4 = arith.divf %2, %3 : vector<128x1xf32>
    %5 = vector.broadcast %4 : vector<128x1xf32> to vector<128x128xf32>
    %6 = arith.subf %0, %5 : vector<128x128xf32>
    %7 = arith.mulf %6, %6 : vector<128x128xf32>
    %cst_2 = arith.constant dense<0.000000e+00> : vector<128xf32>
    %8 = vector.multi_reduction <add>, %7, %cst_2 [1] : vector<128x128xf32> to vector<128xf32>
    %9 = vector.shape_cast %8 : vector<128xf32> to vector<128x1xf32>
    %cst_3 = arith.constant 1.280000e+02 : f32
    %10 = vector.broadcast %cst_3 : f32 to vector<128x1xf32>
    %11 = arith.divf %9, %10 : vector<128x1xf32>
    %12 = vector.broadcast %4 : vector<128x1xf32> to vector<128x128xf32>
    %13 = arith.subf %0, %12 : vector<128x128xf32>
    %cst_4 = arith.constant 9.99999997E-7 : f32
    %14 = vector.broadcast %cst_4 : f32 to vector<128x1xf32>
    %15 = arith.addf %11, %14 : vector<128x1xf32>
    %16 = math.rsqrt %15 : vector<128x1xf32>
    %17 = vector.broadcast %16 : vector<128x1xf32> to vector<128x128xf32>
    %18 = arith.mulf %13, %17 : vector<128x128xf32>
    %19 = arith.truncf %18 : vector<128x128xf32> to vector<128x128xbf16>
    %c0_5 = arith.constant 0 : index
    %c0_6 = arith.constant 0 : index
    %20 = vector.load %arg2[%c0_5, %c0_6] : memref<128x256xbf16, #tpu.memory_space<vmem>>, vector<128x256xbf16>
    %cst_7 = arith.constant dense<0.000000e+00> : vector<128x256xf32>
    %21 = tpu.matmul %19, %20, %cst_7 {dimension_numbers = #tpu.dot_dimension_numbers<[1], [0], [0], [1], [0, 0, 1, 1], [], []>} : vector<128x128xbf16>, vector<128x256xbf16>, vector<128x256xf32> -> vector<128x256xf32>
    %c0_8 = arith.constant 0 : index
    %c0_9 = arith.constant 0 : index
    %22 = vector.load %arg3[%c0_8, %c0_9] : memref<1x256xf32, #tpu.memory_space<vmem>>, vector<1x256xf32>
    %23 = vector.broadcast %22 : vector<1x256xf32> to vector<128x256xf32>
    %24 = arith.addf %21, %23 : vector<128x256xf32>
    %cst_10 = arith.constant 0.000000e+00 : f32
    %25 = vector.broadcast %cst_10 : f32 to vector<128x256xf32>
    %26 = arith.maximumf %24, %25 : vector<128x256xf32>
    %27 = arith.truncf %26 : vector<128x256xf32> to vector<128x256xbf16>
    %c0_11 = arith.constant 0 : index
    %c0_12 = arith.constant 0 : index
    %28 = vector.load %arg4[%c0_11, %c0_12] : memref<256x128xbf16, #tpu.memory_space<vmem>>, vector<256x128xbf16>
    %cst_13 = arith.constant dense<0.000000e+00> : vector<128x128xf32>
    %29 = tpu.matmul %27, %28, %cst_13 {dimension_numbers = #tpu.dot_dimension_numbers<[1], [0], [0], [1], [0, 0, 1, 1], [], []>} : vector<128x256xbf16>, vector<256x128xbf16>, vector<128x128xf32> -> vector<128x128xf32>
    %c0_14 = arith.constant 0 : index
    %c0_15 = arith.constant 0 : index
    %30 = vector.load %arg5[%c0_14, %c0_15] : memref<1x128xf32, #tpu.memory_space<vmem>>, vector<1x128xf32>
    %31 = vector.broadcast %30 : vector<1x128xf32> to vector<128x128xf32>
    %32 = arith.addf %29, %31 : vector<128x128xf32>
    %33 = arith.addf %32, %0 : vector<128x128xf32>
    %c0_16 = arith.constant 0 : index
    %c0_17 = arith.constant 0 : index
    %34 = vector.load %arg6[%c0_16, %c0_17] : memref<128x128xf32, #tpu.memory_space<vmem>>, vector<128x128xf32>
    tpu.vector_store %arg6[%c0_16, %c0_17], %33 {strides = array<i32>} : memref<128x128xf32, #tpu.memory_space<vmem>>, vector<128x128xf32>,
    return
  }
  func.func @transform_0(%arg0: i32) -> (i32, i32) {
    %c0_i32 = arith.constant 0 : i32
    %c0_i32_0 = arith.constant 0 : i32
    return %arg0, %c0_i32 : i32, i32
  }
  func.func @transform_1(%arg0: i32) -> (i32, i32) {
    %c0_i32 = arith.constant 0 : i32
    %c0_i32_0 = arith.constant 0 : i32
    %c0_i32_1 = arith.constant 0 : i32
    return %c0_i32, %c0_i32_0 : i32, i32
  }
  func.func @transform_2(%arg0: i32) -> (i32, i32) {
    %c0_i32 = arith.constant 0 : i32
    %c0_i32_0 = arith.constant 0 : i32
    %c0_i32_1 = arith.constant 0 : i32
    return %c0_i32, %c0_i32_0 : i32, i32
  }
  func.func @transform_3(%arg0: i32) -> (i32, i32) {
    %c0_i32 = arith.constant 0 : i32
    %c0_i32_0 = arith.constant 0 : i32
    %c0_i32_1 = arith.constant 0 : i32
    return %c0_i32, %c0_i32_0 : i32, i32
  }
  func.func @transform_4(%arg0: i32) -> (i32, i32) {
    %c0_i32 = arith.constant 0 : i32
    %c0_i32_0 = arith.constant 0 : i32
    %c0_i32_1 = arith.constant 0 : i32
    return %c0_i32, %c0_i32_0 : i32, i32
  }
  func.func @transform_5(%arg0: i32) -> (i32, i32) {
    %c0_i32 = arith.constant 0 : i32
    %c0_i32_0 = arith.constant 0 : i32
    return %arg0, %c0_i32 : i32, i32
  }
}

</mosaic_0001>

<llo_original>
// kernel: _positionwise_ffn_call.1
$region0: #{_positionwise_ffn_call.1}
  #allocation0 [shape = 'u32[]', space=smem, size = 0x4, offset = 0x4, fixed_abs, tag = 'smem constant byte address 0x4 - core index']
  #allocation1 [shape = 'u32[144,128]{1,0:T(1,128)}', space=vmem, size = 0x12000, scoped, tag = 'internal scratch']
  %s0 = inlined_call_operand.hbm [shape: f32[128,128], index: 0, kind: input, shape index: {}]
  %s1 = inlined_call_operand.hbm [shape: bf16[128,256], index: 1, kind: input, shape index: {}]
  %s2 = inlined_call_operand.hbm [shape: f32[1,256], index: 2, kind: input, shape index: {}]
  %s3 = inlined_call_operand.hbm [shape: bf16[256,128], index: 3, kind: input, shape index: {}]
  %s4 = inlined_call_operand.hbm [shape: f32[1,128], index: 4, kind: input, shape index: {}]
  %s5 = inlined_call_operand.hbm [shape: f32[128,128], index: 5, kind: output, shape index: {}]
  %s6 = sld [smem:[#allocation0]]
  $region50: #{_positionwise_ffn_call.1} parent=0
    _
  %s8 = ssub.s32 1, %s6
  %s9 = scalar_select 0, %s8, %s6
  $region1: #{_positionwise_ffn_call.1} parent=0
    #allocation2 [shape = 'u8[65536]{0}', space=vmem, size = 0x10000, scoped, tag = 'input window, operand 0, single buffered']
    #allocation3 [shape = 's32[1]{0}', space=sflag, size = 0x4, scoped, tag = 'scoped memory for _positionwise_ffn_call.1']
    #allocation4 [shape = 's32[1]{0}', space=sflag, size = 0x4, scoped, tag = 'scoped memory for _positionwise_ffn_call.1']
    #allocation5 [shape = 'u8[65536]{0}', space=vmem, size = 0x10000, scoped, tag = 'input window, operand 1, single buffered']
    #allocation6 [shape = 's32[1]{0}', space=sflag, size = 0x4, scoped, tag = 'scoped memory for _positionwise_ffn_call.1']
    #allocation7 [shape = 'u8[1024]{0}', space=vmem, size = 0x400, scoped, tag = 'input window, operand 2, single buffered']
    #allocation8 [shape = 'u8[65536]{0}', space=vmem, size = 0x10000, scoped, tag = 'input window, operand 3, single buffered']
    #allocation9 [shape = 's32[1]{0}', space=sflag, size = 0x4, scoped, tag = 'scoped memory for _positionwise_ffn_call.1']
    #allocation10 [shape = 'u8[512]{0}', space=vmem, size = 0x400, scoped, tag = 'input window, operand 4, single buffered']
    #allocation11 [shape = 'u8[65536]{0}', space=vmem, size = 0x10000, scoped, tag = 'output window, operand 0, single buffered']
    %10 = vsyncpa [#allocation3], 0
    %11 = vsyncpa [#allocation6], 0
    %12 = vsyncpa [#allocation9], 0
    %13 = vsyncpa [#allocation4], 0
    // Predicated region
    $region2: #{_positionwise_ffn_call.1} parent=1 // pred_check
      _
    $region3: #{_positionwise_ffn_call.1} parent=1 // pred_check_branch
      %15 = sbr.rel (0) target = $region5
    $region4: #{_positionwise_ffn_call.1} parent=1 // pred_region
      %s17 = ssub.s32 2048, 2048
      %18 = vsyncadd [#allocation3], %s17
      %s19 = sshll.u32 [#allocation2], 4
      %s20 = int_to_ptr.vmem [resolvable:$true] %s19
      %25 = dma.hbm_to_vmem [thread:$0]  %s0, 2048, %s20, [#allocation3], 128, 128, 8
    $region5: #{_positionwise_ffn_call.1} parent=1 // pred_fallthru
      _
    // Predicated region
    $region6: #{_positionwise_ffn_call.1} parent=1 // pred_check
      _
    $region7: #{_positionwise_ffn_call.1} parent=1 // pred_check_branch
      %27 = sbr.rel (0) target = $region9
    $region8: #{_positionwise_ffn_call.1} parent=1 // pred_region
      %s29 = ssub.s32 2048, 2048
      %30 = vsyncadd [#allocation6], %s29
      %s31 = sshll.u32 [#allocation5], 4
      %s32 = int_to_ptr.vmem [resolvable:$true] %s31
      %37 = dma.hbm_to_vmem [thread:$0]  %s1, 2048, %s32, [#allocation6], 128, 128, 8
    $region9: #{_positionwise_ffn_call.1} parent=1 // pred_fallthru
      _
    // Predicated region
    $region10: #{_positionwise_ffn_call.1} parent=1 // pred_check
      _
    $region11: #{_positionwise_ffn_call.1} parent=1 // pred_check_branch
      %39 = sbr.rel (0) target = $region13
    $region12: #{_positionwise_ffn_call.1} parent=1 // pred_region
      %s41 = ssub.s32 32, 32
      %42 = vsyncadd [#allocation6], %s41
      %s44 = sshll.u32 [#allocation7], 4
      %s45 = int_to_ptr.vmem [resolvable:$true] %s44
      %47 = dma.hbm_to_vmem [thread:$0]  %s2, 32, %s45, [#allocation6]
    $region13: #{_positionwise_ffn_call.1} parent=1 // pred_fallthru
      _
    // Predicated region
    $region14: #{_positionwise_ffn_call.1} parent=1 // pred_check
      _
    $region15: #{_positionwise_ffn_call.1} parent=1 // pred_check_branch
      %49 = sbr.rel (0) target = $region17
    $region16: #{_positionwise_ffn_call.1} parent=1 // pred_region
      %s51 = ssub.s32 2048, 2048
      %52 = vsyncadd [#allocation9], %s51
      %s53 = sshll.u32 [#allocation8], 4
      %s54 = int_to_ptr.vmem [resolvable:$true] %s53
      %59 = dma.hbm_to_vmem [thread:$0]  %s3, 2048, %s54, [#allocation9], 64, 64, 4
    $region17: #{_positionwise_ffn_call.1} parent=1 // pred_fallthru
      _
    // Predicated region
    $region18: #{_positionwise_ffn_call.1} parent=1 // pred_check
      _
    $region19: #{_positionwise_ffn_call.1} parent=1 // pred_check_branch
      %61 = sbr.rel (0) target = $region21
    $region20: #{_positionwise_ffn_call.1} parent=1 // pred_region
      %s63 = ssub.s32 16, 16
      %64 = vsyncadd [#allocation9], %s63
      %s66 = sshll.u32 [#allocation10], 4
      %s67 = int_to_ptr.vmem [resolvable:$true] %s66
      %69 = dma.hbm_to_vmem [thread:$0]  %s4, 16, %s67, [#allocation9]
    $region21: #{_positionwise_ffn_call.1} parent=1 // pred_fallthru
      _
    // Predicated region
    $region22: #{_positionwise_ffn_call.1} parent=1 // pred_check
      _
    $region23: #{_positionwise_ffn_call.1} parent=1 // pred_check_branch
      %71 = sbr.rel (0) target = $region25
    $region24: #{_positionwise_ffn_call.1} parent=1 // pred_region
      %72 = dma.done [#allocation3], 2048
    $region25: #{_positionwise_ffn_call.1} parent=1 // pred_fallthru
      _
    // Predicated region
    $region26: #{_positionwise_ffn_call.1} parent=1 // pred_check
      _
    $region27: #{_positionwise_ffn_call.1} parent=1 // pred_check_branch
      %74 = sbr.rel (0) target = $region29
    $region28: #{_positionwise_ffn_call.1} parent=1 // pred_region
      %75 = dma.done [#allocation6], 2048
    $region29: #{_positionwise_ffn_call.1} parent=1 // pred_fallthru
      _
    // Predicated region
    $region30: #{_positionwise_ffn_call.1} parent=1 // pred_check
      _
    $region31: #{_positionwise_ffn_call.1} parent=1 // pred_check_branch
      %77 = sbr.rel (0) target = $region33
    $region32: #{_positionwise_ffn_call.1} parent=1 // pred_region
      %78 = dma.done [#allocation6], 32
    $region33: #{_positionwise_ffn_call.1} parent=1 // pred_fallthru
      _
    // Predicated region
    $region34: #{_positionwise_ffn_call.1} parent=1 // pred_check
      _
    $region35: #{_positionwise_ffn_call.1} parent=1 // pred_check_branch
      %80 = sbr.rel (0) target = $region37
    $region36: #{_positionwise_ffn_call.1} parent=1 // pred_region
      %81 = dma.done [#allocation9], 2048
    $region37: #{_positionwise_ffn_call.1} parent=1 // pred_fallthru
      _
    // Predicated region
    $region38: #{_positionwise_ffn_call.1} parent=1 // pred_check
      _
    $region39: #{_positionwise_ffn_call.1} parent=1 // pred_check_branch
      %83 = sbr.rel (0) target = $region41
    $region40: #{_positionwise_ffn_call.1} parent=1 // pred_region
      %84 = dma.done [#allocation9], 16
    $region41: #{_positionwise_ffn_call.1} parent=1 // pred_fallthru
      _
    %v86 = vld [vmem:[#allocation2] sm:$0xff]
    %v87 = vld [vmem:[#allocation2 + $0x8] sm:$0xff]
    %v88 = vld [vmem:[#allocation2 + $0x10] sm:$0xff]
    %v89 = vld [vmem:[#allocation2 + $0x18] sm:$0xff]
    %v90 = vld [vmem:[#allocation2 + $0x20] sm:$0xff]
    %v91 = vld [vmem:[#allocation2 + $0x28] sm:$0xff]
    %v92 = vld [vmem:[#allocation2 + $0x30] sm:$0xff]
    %v93 = vld [vmem:[#allocation2 + $0x38] sm:$0xff]
    %v94 = vld [vmem:[#allocation2 + $0x40] sm:$0xff]
    %v95 = vld [vmem:[#allocation2 + $0x48] sm:$0xff]
    %v96 = vld [vmem:[#allocation2 + $0x50] sm:$0xff]
    %v97 = vld [vmem:[#allocation2 + $0x58] sm:$0xff]
    %v98 = vld [vmem:[#allocation2 + $0x60] sm:$0xff]
    %v99 = vld [vmem:[#allocation2 + $0x68] sm:$0xff]
    %v100 = vld [vmem:[#allocation2 + $0x70] sm:$0xff]
    %v101 = vld [vmem:[#allocation2 + $0x78] sm:$0xff]
    %102 = vadd.xlane.f32.xlu0 %v86
    %v103 = vpop.xlane.xlu0 %102
    %104 = vadd.xlane.f32.xlu0 %v87
    %v105 = vpop.xlane.xlu0 %104
    %106 = vadd.xlane.f32.xlu0 %v88
    %v107 = vpop.xlane.xlu0 %106
    %108 = vadd.xlane.f32.xlu0 %v89
    %v109 = vpop.xlane.xlu0 %108
    %110 = vadd.xlane.f32.xlu0 %v90
    %v111 = vpop.xlane.xlu0 %110
    %112 = vadd.xlane.f32.xlu0 %v91
    %v113 = vpop.xlane.xlu0 %112
    %114 = vadd.xlane.f32.xlu0 %v92
    %v115 = vpop.xlane.xlu0 %114
    %116 = vadd.xlane.f32.xlu0 %v93
    %v117 = vpop.xlane.xlu0 %116
    %118 = vadd.xlane.f32.xlu0 %v94
    %v119 = vpop.xlane.xlu0 %118
    %120 = vadd.xlane.f32.xlu0 %v95
    %v121 = vpop.xlane.xlu0 %120
    %122 = vadd.xlane.f32.xlu0 %v96
    %v123 = vpop.xlane.xlu0 %122
    %124 = vadd.xlane.f32.xlu0 %v97
    %v125 = vpop.xlane.xlu0 %124
    %126 = vadd.xlane.f32.xlu0 %v98
    %v127 = vpop.xlane.xlu0 %126
    %128 = vadd.xlane.f32.xlu0 %v99
    %v129 = vpop.xlane.xlu0 %128
    %130 = vadd.xlane.f32.xlu0 %v100
    %v131 = vpop.xlane.xlu0 %130
    %132 = vadd.xlane.f32.xlu0 %v101
    %v133 = vpop.xlane.xlu0 %132
    %v134 = vrcp.pop 128.0
    %v135 = vmul.f32 %v103, %v134
    %v136 = vmul.f32 %v105, %v134
    %v137 = vmul.f32 %v107, %v134
    %v138 = vmul.f32 %v109, %v134
    %v139 = vmul.f32 %v111, %v134
    %v140 = vmul.f32 %v113, %v134
    %v141 = vmul.f32 %v115, %v134
    %v142 = vmul.f32 %v117, %v134
    %v143 = vmul.f32 %v119, %v134
    %v144 = vmul.f32 %v121, %v134
    %v145 = vmul.f32 %v123, %v134
    %v146 = vmul.f32 %v125, %v134
    %v147 = vmul.f32 %v127, %v134
    %v148 = vmul.f32 %v129, %v134
    %v149 = vmul.f32 %v131, %v134
    %v150 = vmul.f32 %v133, %v134
    %v151 = vsub.f32 %v86, %v135
    %v152 = vsub.f32 %v87, %v136
    %v153 = vsub.f32 %v88, %v137
    %v154 = vsub.f32 %v89, %v138
    %v155 = vsub.f32 %v90, %v139
    %v156 = vsub.f32 %v91, %v140
    %v157 = vsub.f32 %v92, %v141
    %v158 = vsub.f32 %v93, %v142
    %v159 = vsub.f32 %v94, %v143
    %v160 = vsub.f32 %v95, %v144
    %v161 = vsub.f32 %v96, %v145
    %v162 = vsub.f32 %v97, %v146
    %v163 = vsub.f32 %v98, %v147
    %v164 = vsub.f32 %v99, %v148
    %v165 = vsub.f32 %v100, %v149
    %v166 = vsub.f32 %v101, %v150
    %v167 = vmul.f32 %v151, %v151
    %v168 = vmul.f32 %v152, %v152
    %v169 = vmul.f32 %v153, %v153
    %v170 = vmul.f32 %v154, %v154
    %v171 = vmul.f32 %v155, %v155
    %v172 = vmul.f32 %v156, %v156
    %v173 = vmul.f32 %v157, %v157
    %v174 = vmul.f32 %v158, %v158
    %v175 = vmul.f32 %v159, %v159
    %v176 = vmul.f32 %v160, %v160
    %v177 = vmul.f32 %v161, %v161
    %v178 = vmul.f32 %v162, %v162
    %v179 = vmul.f32 %v163, %v163
    %v180 = vmul.f32 %v164, %v164
    %v181 = vmul.f32 %v165, %v165
    %v182 = vmul.f32 %v166, %v166
    %183 = vadd.xlane.f32.xlu0 %v167
    %v184 = vpop.xlane.xlu0 %183
    %185 = vadd.xlane.f32.xlu0 %v168
    %v186 = vpop.xlane.xlu0 %185
    %187 = vadd.xlane.f32.xlu0 %v169
    %v188 = vpop.xlane.xlu0 %187
    %189 = vadd.xlane.f32.xlu0 %v170
    %v190 = vpop.xlane.xlu0 %189
    %191 = vadd.xlane.f32.xlu0 %v171
    %v192 = vpop.xlane.xlu0 %191
    %193 = vadd.xlane.f32.xlu0 %v172
    %v194 = vpop.xlane.xlu0 %193
    %195 = vadd.xlane.f32.xlu0 %v173
    %v196 = vpop.xlane.xlu0 %195
    %197 = vadd.xlane.f32.xlu0 %v174
    %v198 = vpop.xlane.xlu0 %197
    %199 = vadd.xlane.f32.xlu0 %v175
    %v200 = vpop.xlane.xlu0 %199
    %201 = vadd.xlane.f32.xlu0 %v176
    %v202 = vpop.xlane.xlu0 %201
    %203 = vadd.xlane.f32.xlu0 %v177
    %v204 = vpop.xlane.xlu0 %203
    %205 = vadd.xlane.f32.xlu0 %v178
    %v206 = vpop.xlane.xlu0 %205
    %207 = vadd.xlane.f32.xlu0 %v179
    %v208 = vpop.xlane.xlu0 %207
    %209 = vadd.xlane.f32.xlu0 %v180
    %v210 = vpop.xlane.xlu0 %209
    %211 = vadd.xlane.f32.xlu0 %v181
    %v212 = vpop.xlane.xlu0 %211
    %213 = vadd.xlane.f32.xlu0 %v182
    %v214 = vpop.xlane.xlu0 %213
    %v215 = vmul.f32 %v184, %v134
    %v216 = vmul.f32 %v186, %v134
    %v217 = vmul.f32 %v188, %v134
    %v218 = vmul.f32 %v190, %v134
    %v219 = vmul.f32 %v192, %v134
    %v220 = vmul.f32 %v194, %v134
    %v221 = vmul.f32 %v196, %v134
    %v222 = vmul.f32 %v198, %v134
    %v223 = vmul.f32 %v200, %v134
    %v224 = vmul.f32 %v202, %v134
    %v225 = vmul.f32 %v204, %v134
    %v226 = vmul.f32 %v206, %v134
    %v227 = vmul.f32 %v208, %v134
    %v228 = vmul.f32 %v210, %v134
    %v229 = vmul.f32 %v212, %v134
    %v230 = vmul.f32 %v214, %v134
    %v231 = vadd.f32 %v215, 1e-06
    %v232 = vadd.f32 %v216, 1e-06
    %v233 = vadd.f32 %v217, 1e-06
    %v234 = vadd.f32 %v218, 1e-06
    %v235 = vadd.f32 %v219, 1e-06
    %v236 = vadd.f32 %v220, 1e-06
    %v237 = vadd.f32 %v221, 1e-06
    %v238 = vadd.f32 %v222, 1e-06
    %v239 = vadd.f32 %v223, 1e-06
    %v240 = vadd.f32 %v224, 1e-06
    %v241 = vadd.f32 %v225, 1e-06
    %v242 = vadd.f32 %v226, 1e-06
    %v243 = vadd.f32 %v227, 1e-06
    %v244 = vadd.f32 %v228, 1e-06
    %v245 = vadd.f32 %v229, 1e-06
    %v246 = vadd.f32 %v230, 1e-06
    %v247 = vrsqrt.pop %v231
    %v248 = vrsqrt.pop %v232
    %v249 = vrsqrt.pop %v233
    %v250 = vrsqrt.pop %v234
    %v251 = vrsqrt.pop %v235
    %v252 = vrsqrt.pop %v236
    %v253 = vrsqrt.pop %v237
    %v254 = vrsqrt.pop %v238
    %v255 = vrsqrt.pop %v239
    %v256 = vrsqrt.pop %v240
    %v257 = vrsqrt.pop %v241
    %v258 = vrsqrt.pop %v242
    %v259 = vrsqrt.pop %v243
    %v260 = vrsqrt.pop %v244
    %v261 = vrsqrt.pop %v245
    %v262 = vrsqrt.pop %v246
    %v263 = vmul.f32 %v151, %v247
    %v264 = vmul.f32 %v152, %v248
    %v265 = vmul.f32 %v153, %v249
    %v266 = vmul.f32 %v154, %v250
    %v267 = vmul.f32 %v155, %v251
    %v268 = vmul.f32 %v156, %v252
    %v269 = vmul.f32 %v157, %v253
    %v270 = vmul.f32 %v158, %v254
    %v271 = vmul.f32 %v159, %v255
    %v272 = vmul.f32 %v160, %v256
    %v273 = vmul.f32 %v161, %v257
    %v274 = vmul.f32 %v162, %v258
    %v275 = vmul.f32 %v163, %v259
    %v276 = vmul.f32 %v164, %v260
    %v277 = vmul.f32 %v165, %v261
    %v278 = vmul.f32 %v166, %v262
    %v279 = vpack.c.bf16 %v264, %v263
    %v280 = vpack.c.bf16 %v266, %v265
    %v281 = vpack.c.bf16 %v268, %v267
    %v282 = vpack.c.bf16 %v270, %v269
    %v283 = vpack.c.bf16 %v272, %v271
    %v284 = vpack.c.bf16 %v274, %v273
    %v285 = vpack.c.bf16 %v276, %v275
    %v286 = vpack.c.bf16 %v278, %v277
    %v287 = vld [vmem:[#allocation5] sm:$0xff]
    %v288 = vld [vmem:[#allocation5 + $0x8] sm:$0xff]
    %v289 = vld [vmem:[#allocation5 + $0x10] sm:$0xff]
    %v290 = vld [vmem:[#allocation5 + $0x18] sm:$0xff]
    %v291 = vld [vmem:[#allocation5 + $0x20] sm:$0xff]
    %v292 = vld [vmem:[#allocation5 + $0x28] sm:$0xff]
    %v293 = vld [vmem:[#allocation5 + $0x30] sm:$0xff]
    %v294 = vld [vmem:[#allocation5 + $0x38] sm:$0xff]
    %v295 = vld [vmem:[#allocation5 + $0x40] sm:$0xff]
    %v296 = vld [vmem:[#allocation5 + $0x48] sm:$0xff]
    %v297 = vld [vmem:[#allocation5 + $0x50] sm:$0xff]
    %v298 = vld [vmem:[#allocation5 + $0x58] sm:$0xff]
    %v299 = vld [vmem:[#allocation5 + $0x60] sm:$0xff]
    %v300 = vld [vmem:[#allocation5 + $0x68] sm:$0xff]
    %v301 = vld [vmem:[#allocation5 + $0x70] sm:$0xff]
    %v302 = vld [vmem:[#allocation5 + $0x78] sm:$0xff]
    %v303 = vld [vmem:[#allocation7] sm:$0x3]
    %v305 = vlaneseq
    %v306 = vshrl.u32 %v305, 7
    %v307 = vsub.s32 0, %v306
    %v308 = vrot.slane %v303, %v307
    %v309 = vlaneseq
    %v310 = vshrl.u32 %v309, 7
    %v311 = vsub.s32 1, %v310
    %v312 = vrot.slane %v303, %v311
    %v331 = vunpack.c.l.b16 %v287
    %v332 = vunpack.c.h.b16 %v287
    %v333 = vunpack.c.l.b16 %v288
    %v334 = vunpack.c.h.b16 %v288
    %v335 = vunpack.c.l.b16 %v289
    %v336 = vunpack.c.h.b16 %v289
    %v337 = vunpack.c.l.b16 %v290
    %v338 = vunpack.c.h.b16 %v290
    %v339 = vunpack.c.l.b16 %v291
    %v340 = vunpack.c.h.b16 %v291
    %v341 = vunpack.c.l.b16 %v292
    %v342 = vunpack.c.h.b16 %v292
    %v343 = vunpack.c.l.b16 %v293
    %v344 = vunpack.c.h.b16 %v293
    %v345 = vunpack.c.l.b16 %v294
    %v346 = vunpack.c.h.b16 %v294
    %v347 = vunpack.c.l.b16 %v295
    %v348 = vunpack.c.h.b16 %v295
    %v349 = vunpack.c.l.b16 %v296
    %v350 = vunpack.c.h.b16 %v296
    %v351 = vunpack.c.l.b16 %v297
    %v352 = vunpack.c.h.b16 %v297
    %v353 = vunpack.c.l.b16 %v298
    %v354 = vunpack.c.h.b16 %v298
    %v355 = vunpack.c.l.b16 %v299
    %v356 = vunpack.c.h.b16 %v299
    %v357 = vunpack.c.l.b16 %v300
    %v358 = vunpack.c.h.b16 %v300
    %v359 = vunpack.c.l.b16 %v301
    %v360 = vunpack.c.h.b16 %v301
    %v361 = vunpack.c.l.b16 %v302
    %v362 = vunpack.c.h.b16 %v302
    %v363 = vpack.c.b16 %v333, %v331
    %v364 = vpack.c.b16 %v334, %v332
    %v365 = vpack.c.b16 %v337, %v335
    %v366 = vpack.c.b16 %v338, %v336
    %v367 = vpack.c.b16 %v341, %v339
    %v368 = vpack.c.b16 %v342, %v340
    %v369 = vpack.c.b16 %v345, %v343
    %v370 = vpack.c.b16 %v346, %v344
    %v371 = vpack.c.b16 %v349, %v347
    %v372 = vpack.c.b16 %v350, %v348
    %v373 = vpack.c.b16 %v353, %v351
    %v374 = vpack.c.b16 %v354, %v352
    %v375 = vpack.c.b16 %v357, %v355
    %v376 = vpack.c.b16 %v358, %v356
    %v377 = vpack.c.b16 %v361, %v359
    %v378 = vpack.c.b16 %v362, %v360
    %395 = vmatprep.subr.bf16.mxu0 %v364
    %396 = vmatpush1.bf16.msra.mxu0 %v363
    %397 = vmatprep.subr.bf16.mxu0 %v366
    %398 = vmatpush1.bf16.msra.mxu0 %v365
    %399 = vmatprep.subr.bf16.mxu0 %v368
    %400 = vmatpush1.bf16.msra.mxu0 %v367
    %401 = vmatprep.subr.bf16.mxu0 %v370
    %402 = vmatpush1.bf16.msra.mxu0 %v369
    %403 = vmatprep.subr.bf16.mxu0 %v372
    %404 = vmatpush1.bf16.msra.mxu0 %v371
    %405 = vmatprep.subr.bf16.mxu0 %v374
    %406 = vmatpush1.bf16.msra.mxu0 %v373
    %407 = vmatprep.subr.bf16.mxu0 %v376
    %408 = vmatpush1.bf16.msra.mxu0 %v375
    %409 = vmatprep.subr.bf16.mxu0 %v378
    %410 = vmatpush1.bf16.msra.mxu0 %v377
    %411 = vmatprep.subr.bf16.mxu0 0
    %412 = vmatpush1.bf16.msra.mxu0 0
    %413 = vmatprep.subr.bf16.mxu0 0
    %414 = vmatpush1.bf16.msra.mxu0 0
    %415 = vmatprep.subr.bf16.mxu0 0
    %416 = vmatpush1.bf16.msra.mxu0 0
    %417 = vmatprep.subr.bf16.mxu0 0
    %418 = vmatpush1.bf16.msra.mxu0 0
    %419 = vmatprep.subr.bf16.mxu0 0
    %420 = vmatpush1.bf16.msra.mxu0 0
    %421 = vmatprep.subr.bf16.mxu0 0
    %422 = vmatpush1.bf16.msra.mxu0 0
    %423 = vmatprep.subr.bf16.mxu0 0
    %424 = vmatpush1.bf16.msra.mxu0 0
    %425 = vmatprep.subr.bf16.mxu0 0
    %426 = vmatpush1.bf16.msra.mxu0 0
    %427 = vmatprep.mubr.bf16.mxu0 0
    %428 = vmatmul.mubr.bf16.gmra.mrb[0].mxu0 %v279
    %v429 = vpop.f32.mrb[0].mxu0
    %v430 = vadd.f32 %v308, %v429
    %v431 = vpop.f32.mrb[0].mxu0
    %v432 = vadd.f32 %v312, %v431
    %v433 = vpop.f32.mrb[0].mxu0
    %v434 = vadd.f32 %v308, %v433
    %v435 = vpop.f32.mrb[0].mxu0
    %v436 = vadd.f32 %v312, %v435
    %437 = vmatprep.mubr.bf16.mxu0 0
    %438 = vmatmul.mubr.bf16.gmra.mrb[0].mxu0 %v280
    %v439 = vpop.f32.mrb[0].mxu0
    %v440 = vadd.f32 %v308, %v439
    %v441 = vpop.f32.mrb[0].mxu0
    %v442 = vadd.f32 %v312, %v441
    %v443 = vpop.f32.mrb[0].mxu0
    %v444 = vadd.f32 %v308, %v443
    %v445 = vpop.f32.mrb[0].mxu0
    %v446 = vadd.f32 %v312, %v445
    %447 = vmatprep.mubr.bf16.mxu0 0
    %448 = vmatmul.mubr.bf16.gmra.mrb[0].mxu0 %v281
    %v449 = vpop.f32.mrb[0].mxu0
    %v450 = vadd.f32 %v308, %v449
    %v451 = vpop.f32.mrb[0].mxu0
    %v452 = vadd.f32 %v312, %v451
    %v453 = vpop.f32.mrb[0].mxu0
    %v454 = vadd.f32 %v308, %v453
    %v455 = vpop.f32.mrb[0].mxu0
    %v456 = vadd.f32 %v312, %v455
    %457 = vmatprep.mubr.bf16.mxu0 0
    %458 = vmatmul.mubr.bf16.gmra.mrb[0].mxu0 %v282
    %v459 = vpop.f32.mrb[0].mxu0
    %v460 = vadd.f32 %v308, %v459
    %v461 = vpop.f32.mrb[0].mxu0
    %v462 = vadd.f32 %v312, %v461
    %v463 = vpop.f32.mrb[0].mxu0
    %v464 = vadd.f32 %v308, %v463
    %v465 = vpop.f32.mrb[0].mxu0
    %v466 = vadd.f32 %v312, %v465
    %467 = vmatprep.mubr.bf16.mxu0 0
    %468 = vmatmul.mubr.bf16.gmra.mrb[0].mxu0 %v283
    %v469 = vpop.f32.mrb[0].mxu0
    %v470 = vadd.f32 %v308, %v469
    %v471 = vpop.f32.mrb[0].mxu0
    %v472 = vadd.f32 %v312, %v471
    %v473 = vpop.f32.mrb[0].mxu0
    %v474 = vadd.f32 %v308, %v473
    %v475 = vpop.f32.mrb[0].mxu0
    %v476 = vadd.f32 %v312, %v475
    %477 = vmatprep.mubr.bf16.mxu0 0
    %478 = vmatmul.mubr.bf16.gmra.mrb[0].mxu0 %v284
    %v479 = vpop.f32.mrb[0].mxu0
    %v480 = vadd.f32 %v308, %v479
    %v481 = vpop.f32.mrb[0].mxu0
    %v482 = vadd.f32 %v312, %v481
    %v483 = vpop.f32.mrb[0].mxu0
    %v484 = vadd.f32 %v308, %v483
    %v485 = vpop.f32.mrb[0].mxu0
    %v486 = vadd.f32 %v312, %v485
    %487 = vmatprep.mubr.bf16.mxu0 0
    %488 = vmatmul.mubr.bf16.gmra.mrb[0].mxu0 %v285
    %v489 = vpop.f32.mrb[0].mxu0
    %v490 = vadd.f32 %v308, %v489
    %v491 = vpop.f32.mrb[0].mxu0
    %v492 = vadd.f32 %v312, %v491
    %v493 = vpop.f32.mrb[0].mxu0
    %v494 = vadd.f32 %v308, %v493
    %v495 = vpop.f32.mrb[0].mxu0
    %v496 = vadd.f32 %v312, %v495
    %497 = vmatprep.mubr.bf16.mxu0 0
    %498 = vmatmul.mubr.bf16.gmra.mrb[0].mxu0 %v286
    %v499 = vpop.f32.mrb[0].mxu0
    %v500 = vadd.f32 %v308, %v499
    %v501 = vpop.f32.mrb[0].mxu0
    %v502 = vadd.f32 %v312, %v501
    %v503 = vpop.f32.mrb[0].mxu0
    %v504 = vadd.f32 %v308, %v503
    %v505 = vpop.f32.mrb[0].mxu0
    %v506 = vadd.f32 %v312, %v505
    %507 = vdwg.mxu0
    %v508 = vmax.f32 %v430, 0.0
    %v509 = vmax.f32 %v432, 0.0
    %v510 = vmax.f32 %v434, 0.0
    %v511 = vmax.f32 %v436, 0.0
    %v512 = vmax.f32 %v440, 0.0
    %v513 = vmax.f32 %v442, 0.0
    %v514 = vmax.f32 %v444, 0.0
    %v515 = vmax.f32 %v446, 0.0
    %v516 = vmax.f32 %v450, 0.0
    %v517 = vmax.f32 %v452, 0.0
    %v518 = vmax.f32 %v454, 0.0
    %v519 = vmax.f32 %v456, 0.0
    %v520 = vmax.f32 %v460, 0.0
    %v521 = vmax.f32 %v462, 0.0
    %v522 = vmax.f32 %v464, 0.0
    %v523 = vmax.f32 %v466, 0.0
    %v524 = vmax.f32 %v470, 0.0
    %v525 = vmax.f32 %v472, 0.0
    %v526 = vmax.f32 %v474, 0.0
    %v527 = vmax.f32 %v476, 0.0
    %v528 = vmax.f32 %v480, 0.0
    %v529 = vmax.f32 %v482, 0.0
    %v530 = vmax.f32 %v484, 0.0
    %v531 = vmax.f32 %v486, 0.0
    %v532 = vmax.f32 %v490, 0.0
    %v533 = vmax.f32 %v492, 0.0
    %v534 = vmax.f32 %v494, 0.0
    %v535 = vmax.f32 %v496, 0.0
    %v536 = vmax.f32 %v500, 0.0
    %v537 = vmax.f32 %v502, 0.0
    %v538 = vmax.f32 %v504, 0.0
    %v539 = vmax.f32 %v506, 0.0
    %v540 = vpack.c.bf16 %v510, %v508
    %v541 = vpack.c.bf16 %v511, %v509
    %v542 = vpack.c.bf16 %v514, %v512
    %v543 = vpack.c.bf16 %v515, %v513
    %v544 = vpack.c.bf16 %v518, %v516
    %v545 = vpack.c.bf16 %v519, %v517
    %v546 = vpack.c.bf16 %v522, %v520
    %v547 = vpack.c.bf16 %v523, %v521
    %v548 = vpack.c.bf16 %v526, %v524
    %v549 = vpack.c.bf16 %v527, %v525
    %v550 = vpack.c.bf16 %v530, %v528
    %v551 = vpack.c.bf16 %v531, %v529
    %v552 = vpack.c.bf16 %v534, %v532
    %v553 = vpack.c.bf16 %v535, %v533
    %v554 = vpack.c.bf16 %v538, %v536
    %v555 = vpack.c.bf16 %v539, %v537
    %v556 = vld [vmem:[#allocation8] sm:$0xf]
    %v557 = vld [vmem:[#allocation8 + $0x4] sm:$0xf]
    %v558 = vld [vmem:[#allocation8 + $0x8] sm:$0xf]
    %v559 = vld [vmem:[#allocation8 + $0xc] sm:$0xf]
    %v560 = vld [vmem:[#allocation8 + $0x10] sm:$0xf]
    %v561 = vld [vmem:[#allocation8 + $0x14] sm:$0xf]
    %v562 = vld [vmem:[#allocation8 + $0x18] sm:$0xf]
    %v563 = vld [vmem:[#allocation8 + $0x1c] sm:$0xf]
    %v564 = vld [vmem:[#allocation8 + $0x20] sm:$0xf]
    %v565 = vld [vmem:[#allocation8 + $0x24] sm:$0xf]
    %v566 = vld [vmem:[#allocation8 + $0x28] sm:$0xf]
    %v567 = vld [vmem:[#allocation8 + $0x2c] sm:$0xf]
    %v568 = vld [vmem:[#allocation8 + $0x30] sm:$0xf]
    %v569 = vld [vmem:[#allocation8 + $0x34] sm:$0xf]
    %v570 = vld [vmem:[#allocation8 + $0x38] sm:$0xf]
    %v571 = vld [vmem:[#allocation8 + $0x3c] sm:$0xf]
    %v572 = vld [vmem:[#allocation8 + $0x40] sm:$0xf]
    %v573 = vld [vmem:[#allocation8 + $0x44] sm:$0xf]
    %v574 = vld [vmem:[#allocation8 + $0x48] sm:$0xf]
    %v575 = vld [vmem:[#allocation8 + $0x4c] sm:$0xf]
    %v576 = vld [vmem:[#allocation8 + $0x50] sm:$0xf]
    %v577 = vld [vmem:[#allocation8 + $0x54] sm:$0xf]
    %v578 = vld [vmem:[#allocation8 + $0x58] sm:$0xf]
    %v579 = vld [vmem:[#allocation8 + $0x5c] sm:$0xf]
    %v580 = vld [vmem:[#allocation8 + $0x60] sm:$0xf]
    %v581 = vld [vmem:[#allocation8 + $0x64] sm:$0xf]
    %v582 = vld [vmem:[#allocation8 + $0x68] sm:$0xf]
    %v583 = vld [vmem:[#allocation8 + $0x6c] sm:$0xf]
    %v584 = vld [vmem:[#allocation8 + $0x70] sm:$0xf]
    %v585 = vld [vmem:[#allocation8 + $0x74] sm:$0xf]
    %v586 = vld [vmem:[#allocation8 + $0x78] sm:$0xf]
    %v587 = vld [vmem:[#allocation8 + $0x7c] sm:$0xf]
    %v588 = vld [vmem:[#allocation10] sm:$0x1]
    %v590 = vlaneseq
    %v591 = vshrl.u32 %v590, 7
    %v592 = vsub.s32 0, %v591
    %v593 = vrot.slane %v588, %v592
    %v627 = vunpack.c.l.b16 %v556
    %v628 = vunpack.c.l.b16 %v557
    %v629 = vunpack.c.l.b16 %v558
    %v630 = vunpack.c.l.b16 %v559
    %v631 = vunpack.c.l.b16 %v560
    %v632 = vunpack.c.l.b16 %v561
    %v633 = vunpack.c.l.b16 %v562
    %v634 = vunpack.c.l.b16 %v563
    %v635 = vunpack.c.l.b16 %v564
    %v636 = vunpack.c.l.b16 %v565
    %v637 = vunpack.c.l.b16 %v566
    %v638 = vunpack.c.l.b16 %v567
    %v639 = vunpack.c.l.b16 %v568
    %v640 = vunpack.c.l.b16 %v569
    %v641 = vunpack.c.l.b16 %v570
    %v642 = vunpack.c.l.b16 %v571
    %v643 = vunpack.c.l.b16 %v572
    %v644 = vunpack.c.l.b16 %v573
    %v645 = vunpack.c.l.b16 %v574
    %v646 = vunpack.c.l.b16 %v575
    %v647 = vunpack.c.l.b16 %v576
    %v648 = vunpack.c.l.b16 %v577
    %v649 = vunpack.c.l.b16 %v578
    %v650 = vunpack.c.l.b16 %v579
    %v651 = vunpack.c.l.b16 %v580
    %v652 = vunpack.c.l.b16 %v581
    %v653 = vunpack.c.l.b16 %v582
    %v654 = vunpack.c.l.b16 %v583
    %v655 = vunpack.c.l.b16 %v584
    %v656 = vunpack.c.l.b16 %v585
    %v657 = vunpack.c.l.b16 %v586
    %v658 = vunpack.c.l.b16 %v587
    %v659 = vpack.c.b16 %v628, %v627
    %v660 = vpack.c.b16 %v630, %v629
    %v661 = vpack.c.b16 %v632, %v631
    %v662 = vpack.c.b16 %v634, %v633
    %v663 = vpack.c.b16 %v636, %v635
    %v664 = vpack.c.b16 %v638, %v637
    %v665 = vpack.c.b16 %v640, %v639
    %v666 = vpack.c.b16 %v642, %v641
    %v667 = vpack.c.b16 %v644, %v643
    %v668 = vpack.c.b16 %v646, %v645
    %v669 = vpack.c.b16 %v648, %v647
    %v670 = vpack.c.b16 %v650, %v649
    %v671 = vpack.c.b16 %v652, %v651
    %v672 = vpack.c.b16 %v654, %v653
    %v673 = vpack.c.b16 %v656, %v655
    %v674 = vpack.c.b16 %v658, %v657
    %691 = vmatprep.subr.bf16.mxu0 0
    %692 = vmatpush1.bf16.msra.mxu0 %v659
    %693 = vmatprep.subr.bf16.mxu0 0
    %694 = vmatpush1.bf16.msra.mxu0 %v660
    %695 = vmatprep.subr.bf16.mxu0 0
    %696 = vmatpush1.bf16.msra.mxu0 %v661
    %697 = vmatprep.subr.bf16.mxu0 0
    %698 = vmatpush1.bf16.msra.mxu0 %v662
    %699 = vmatprep.subr.bf16.mxu0 0
    %700 = vmatpush1.bf16.msra.mxu0 %v663
    %701 = vmatprep.subr.bf16.mxu0 0
    %702 = vmatpush1.bf16.msra.mxu0 %v664
    %703 = vmatprep.subr.bf16.mxu0 0
    %704 = vmatpush1.bf16.msra.mxu0 %v665
    %705 = vmatprep.subr.bf16.mxu0 0
    %706 = vmatpush1.bf16.msra.mxu0 %v666
    %707 = vmatprep.subr.bf16.mxu0 0
    %708 = vmatpush1.bf16.msra.mxu0 %v667
    %709 = vmatprep.subr.bf16.mxu0 0
    %710 = vmatpush1.bf16.msra.mxu0 %v668
    %711 = vmatprep.subr.bf16.mxu0 0
    %712 = vmatpush1.bf16.msra.mxu0 %v669
    %713 = vmatprep.subr.bf16.mxu0 0
    %714 = vmatpush1.bf16.msra.mxu0 %v670
    %715 = vmatprep.subr.bf16.mxu0 0
    %716 = vmatpush1.bf16.msra.mxu0 %v671
    %717 = vmatprep.subr.bf16.mxu0 0
    %718 = vmatpush1.bf16.msra.mxu0 %v672
    %719 = vmatprep.subr.bf16.mxu0 0
    %720 = vmatpush1.bf16.msra.mxu0 %v673
    %721 = vmatprep.subr.bf16.mxu0 0
    %722 = vmatpush1.bf16.msra.mxu0 %v674
    %723 = vmatprep.mubr.bf16.mxu0 %v541
    %724 = vmatmul.mubr.bf16.gmra.mrb[0].mxu0 %v540
    %v725 = vpop.f32.mrb[0].mxu0
    %v726 = vadd.f32 %v593, %v725
    %v727 = vpop.f32.mrb[0].mxu0
    %v728 = vpop.f32.mrb[0].mxu0
    %v729 = vadd.f32 %v593, %v728
    %v730 = vpop.f32.mrb[0].mxu0
    %731 = vmatprep.mubr.bf16.mxu0 %v543
    %732 = vmatmul.mubr.bf16.gmra.mrb[0].mxu0 %v542
    %v733 = vpop.f32.mrb[0].mxu0
    %v734 = vadd.f32 %v593, %v733
    %v735 = vpop.f32.mrb[0].mxu0
    %v736 = vpop.f32.mrb[0].mxu0
    %v737 = vadd.f32 %v593, %v736
    %v738 = vpop.f32.mrb[0].mxu0
    %739 = vmatprep.mubr.bf16.mxu0 %v545
    %740 = vmatmul.mubr.bf16.gmra.mrb[0].mxu0 %v544
    %v741 = vpop.f32.mrb[0].mxu0
    %v742 = vadd.f32 %v593, %v741
    %v743 = vpop.f32.mrb[0].mxu0
    %v744 = vpop.f32.mrb[0].mxu0
    %v745 = vadd.f32 %v593, %v744
    %v746 = vpop.f32.mrb[0].mxu0
    %747 = vmatprep.mubr.bf16.mxu0 %v547
    %748 = vmatmul.mubr.bf16.gmra.mrb[0].mxu0 %v546
    %v749 = vpop.f32.mrb[0].mxu0
    %v750 = vadd.f32 %v593, %v749
    %v751 = vpop.f32.mrb[0].mxu0
    %v752 = vpop.f32.mrb[0].mxu0
    %v753 = vadd.f32 %v593, %v752
    %v754 = vpop.f32.mrb[0].mxu0
    %755 = vmatprep.mubr.bf16.mxu0 %v549
    %756 = vmatmul.mubr.bf16.gmra.mrb[0].mxu0 %v548
    %v757 = vpop.f32.mrb[0].mxu0
    %v758 = vadd.f32 %v593, %v757
    %v759 = vpop.f32.mrb[0].mxu0
    %v760 = vpop.f32.mrb[0].mxu0
    %v761 = vadd.f32 %v593, %v760
    %v762 = vpop.f32.mrb[0].mxu0
    %763 = vmatprep.mubr.bf16.mxu0 %v551
    %764 = vmatmul.mubr.bf16.gmra.mrb[0].mxu0 %v550
    %v765 = vpop.f32.mrb[0].mxu0
    %v766 = vadd.f32 %v593, %v765
    %v767 = vpop.f32.mrb[0].mxu0
    %v768 = vpop.f32.mrb[0].mxu0
    %v769 = vadd.f32 %v593, %v768
    %v770 = vpop.f32.mrb[0].mxu0
    %771 = vmatprep.mubr.bf16.mxu0 %v553
    %772 = vmatmul.mubr.bf16.gmra.mrb[0].mxu0 %v552
    %v773 = vpop.f32.mrb[0].mxu0
    %v774 = vadd.f32 %v593, %v773
    %v775 = vpop.f32.mrb[0].mxu0
    %v776 = vpop.f32.mrb[0].mxu0
    %v777 = vadd.f32 %v593, %v776
    %v778 = vpop.f32.mrb[0].mxu0
    %779 = vmatprep.mubr.bf16.mxu0 %v555
    %780 = vmatmul.mubr.bf16.gmra.mrb[0].mxu0 %v554
    %v781 = vpop.f32.mrb[0].mxu0
    %v782 = vadd.f32 %v593, %v781
    %v783 = vpop.f32.mrb[0].mxu0
    %v784 = vpop.f32.mrb[0].mxu0
    %v785 = vadd.f32 %v593, %v784
    %v786 = vpop.f32.mrb[0].mxu0
    %787 = vdwg.mxu0
    %v788 = vadd.f32 %v726, %v86
    %v789 = vadd.f32 %v729, %v87
    %v790 = vadd.f32 %v734, %v88
    %v791 = vadd.f32 %v737, %v89
    %v792 = vadd.f32 %v742, %v90
    %v793 = vadd.f32 %v745, %v91
    %v794 = vadd.f32 %v750, %v92
    %v795 = vadd.f32 %v753, %v93
    %v796 = vadd.f32 %v758, %v94
    %v797 = vadd.f32 %v761, %v95
    %v798 = vadd.f32 %v766, %v96
    %v799 = vadd.f32 %v769, %v97
    %v800 = vadd.f32 %v774, %v98
    %v801 = vadd.f32 %v777, %v99
    %v802 = vadd.f32 %v782, %v100
    %v803 = vadd.f32 %v785, %v101
    %804 = vst [vmem:[#allocation11] sm:$0xff] %v788
    %805 = vst [vmem:[#allocation11 + $0x8] sm:$0xff] %v789
    %806 = vst [vmem:[#allocation11 + $0x10] sm:$0xff] %v790
    %807 = vst [vmem:[#allocation11 + $0x18] sm:$0xff] %v791
    %808 = vst [vmem:[#allocation11 + $0x20] sm:$0xff] %v792
    %809 = vst [vmem:[#allocation11 + $0x28] sm:$0xff] %v793
    %810 = vst [vmem:[#allocation11 + $0x30] sm:$0xff] %v794
    %811 = vst [vmem:[#allocation11 + $0x38] sm:$0xff] %v795
    %812 = vst [vmem:[#allocation11 + $0x40] sm:$0xff] %v796
    %813 = vst [vmem:[#allocation11 + $0x48] sm:$0xff] %v797
    %814 = vst [vmem:[#allocation11 + $0x50] sm:$0xff] %v798
    %815 = vst [vmem:[#allocation11 + $0x58] sm:$0xff] %v799
    %816 = vst [vmem:[#allocation11 + $0x60] sm:$0xff] %v800
    %817 = vst [vmem:[#allocation11 + $0x68] sm:$0xff] %v801
    %818 = vst [vmem:[#allocation11 + $0x70] sm:$0xff] %v802
    %819 = vst [vmem:[#allocation11 + $0x78] sm:$0xff] %v803
    // Predicated region
    $region42: #{_positionwise_ffn_call.1} parent=1 // pred_check
      _
    $region43: #{_positionwise_ffn_call.1} parent=1 // pred_check_branch
      %821 = sbr.rel (0) target = $region45
    $region44: #{_positionwise_ffn_call.1} parent=1 // pred_region
      %s823 = ssub.s32 2048, 2048
      %824 = vsyncadd [#allocation4], %s823
      %s825 = sshll.u32 [#allocation11], 4
      %s826 = int_to_ptr.vmem [resolvable:$true] %s825
      %831 = dma.vmem_to_hbm [thread:$0]  %s826, 2048, %s5, [#allocation4], 128, 128, 8
    $region45: #{_positionwise_ffn_call.1} parent=1 // pred_fallthru
      _
    // Predicated region
    $region46: #{_positionwise_ffn_call.1} parent=1 // pred_check
      _
    $region47: #{_positionwise_ffn_call.1} parent=1 // pred_check_branch
      %833 = sbr.rel (0) target = $region49
    $region48: #{_positionwise_ffn_call.1} parent=1 // pred_region
      %834 = dma.done [#allocation4], 2048
    $region49: #{_positionwise_ffn_call.1} parent=1 // pred_fallthru
      _
    %835 = vsyncpa [#allocation3], 1
    %836 = vsyncpa [#allocation6], 1
    %837 = vsyncpa [#allocation9], 1
    %838 = vsyncpa [#allocation4], 1

</llo_original>
